<compile_context>
chip_gen: v5e
topology: v5e:2x2
jax: 0.10.0
libtpu: 0.0.40
codegen_flags: <defaults>
</compile_context>

<pallas_src>
import functools

import jax
import jax.numpy as jnp
from jax.experimental import pallas as pl
from jax.experimental.pallas import tpu as pltpu


def _make_attention_kernel(num_inputs, k):
    """Kernel for a static number of stacked inputs and lane-fold factor k."""

    def kernel(*refs):
        if k > 1:
            wseg_ref, e_ref, b_ref = refs[0], refs[1], refs[2]
            x_refs = refs[3:3 + num_inputs]
            o_ref = refs[3 + num_inputs]
        else:
            wseg_ref, b_ref = refs[0], refs[1]
            e_ref = None
            x_refs = refs[2:2 + num_inputs]
            o_ref = refs[2 + num_inputs]

        wseg = wseg_ref[...]                        # (C_k, k) f32, block-diagonal
        b = b_ref[0, 0]                             # scalar f32 (SMEM)

        # ---- Pass 1: stream each input once; keep only the (TB, k) logits ----
        # logits_n[r, i] = sum_c x_n[row(r, i), c] * w[c] + bias   (MXU matmul)
        logits = []
        for x_ref in x_refs:
            x = x_ref[...].astype(jnp.float32)      # (TB, C_k)
            logits.append(
                jnp.dot(x, wseg, preferred_element_type=jnp.float32) + b)

        # Softmax over the stacked-inputs axis, done elementwise across the N
        # (TB, k) logit tiles (never materializes a (TB, N, C) stack).
        m = functools.reduce(jnp.maximum, logits)
        es = [jnp.exp(l - m) for l in logits]
        s = functools.reduce(lambda a, c: a + c, es)
        inv_s = pl.reciprocal(s, approx=True)       # EUP reciprocal (free slot)

        # ---- Pass 2: re-stream each input; accumulate attn_n * x_n ----
        out = None
        for n, x_ref in enumerate(x_refs):
            attn = es[n] * inv_s                    # (TB, k)
            if k > 1:
                # Broadcast each segment's weight back across its C lanes.
                a_exp = jnp.dot(attn, e_ref[...],
                                preferred_element_type=jnp.float32)  # (TB, C_k)
            else:
                a_exp = attn                        # (TB, 1) broadcasts over C
            term = a_exp * x_ref[...].astype(jnp.float32)
            out = term if out is None else out + term

        o_ref[...] = out.astype(o_ref.dtype)

    return kernel


def _sublane_multiple(dtype):
    # f32 -> 8, bf16 -> 16, int8/fp8 -> 32 (sublane packing multiples)
    return {4: 8, 2: 16, 1: 32}.get(jnp.dtype(dtype).itemsize, 8)


def _vmem_capacity_bytes():
    try:
        return int(pltpu.get_tpu_info().vmem_capacity_bytes)
    except Exception:
        return 64 * 1024 * 1024        # conservative fallback (v7x physical)


def _choose_rows_tile(rows, num_inputs, c_kernel, in_itemsize, out_itemsize,
                      sub, budget):
    """Largest sublane-aligned row tile whose double-buffered working set
    (lane-padded, plus f32 working headroom) fits the VMEM budget; capped so
    the grid keeps >= 2 steps when the batch allows (v7x megacore)."""
    c_pad = pl.cdiv(c_kernel, 128) * 128
    per_row = (2 * (num_inputs * c_pad * in_itemsize + c_pad * out_itemsize)
               + 4 * c_pad * 4)        # + f32 intermediates / spill headroom
    tb = (budget // max(per_row, 1)) // sub * sub
    tb = max(sub, min(tb, 2048))
    if tb >= rows:
        if rows >= 2 * sub:
            half = -(-rows // 2)                   # ceil(rows / 2)
            tb = -(-half // sub) * sub             # round up to sublane multiple
        else:
            tb = rows                              # full-dim block (always legal)
    return tb


def attention_forward(inputs, weight, bias):
    """inputs: list of N arrays, each (B, C). weight: (1, C). bias: (1,)."""
    num_inputs = len(inputs)
    B, C = inputs[0].shape
    dtype = inputs[0].dtype
    itemsize = jnp.dtype(dtype).itemsize

    # Lane-dense folding: view (B, C) as (B*C/128, 128) when C < 128.
    if C < 128 and 128 % C == 0 and (B * C) % 128 == 0:
        k = 128 // C
        rows, c_kernel = B // k, 128
        xs = [x.reshape(rows, c_kernel) for x in inputs]   # free row-major reshape
    else:
        k = 1
        rows, c_kernel = B, C
        xs = list(inputs)

    # Linear(C, 1) weight as a block-diagonal (C_k, k) matrix; E broadcasts a
    # segment's attention weight back across that segment's lanes.
    w_flat = jnp.asarray(weight, jnp.float32).reshape(-1)            # (C,)
    onehot = (jnp.arange(c_kernel)[:, None] // C
              == jnp.arange(k)[None, :]).astype(jnp.float32)         # (C_k, k)
    w_seg = onehot * jnp.tile(w_flat, k)[:, None]                    # (C_k, k)
    e_mat = onehot.T                                                 # (k, C_k)
    b2d = jnp.asarray(bias, jnp.float32).reshape(1, 1)               # SMEM scalar

    vmem_cap = _vmem_capacity_bytes()
    sub = _sublane_multiple(dtype)
    tb = _choose_rows_tile(rows, num_inputs, c_kernel, itemsize, itemsize,
                           sub, budget=vmem_cap // 2)
    num_tiles = pl.cdiv(rows, tb)

    x_spec = pl.BlockSpec((tb, c_kernel), lambda i: (i, 0))
    in_specs = [pl.BlockSpec((c_kernel, k), lambda i: (0, 0))]       # w_seg
    extra = [w_seg]
    if k > 1:
        in_specs.append(pl.BlockSpec((k, c_kernel), lambda i: (0, 0)))  # E
        extra.append(e_mat)
    in_specs.append(pl.BlockSpec(memory_space=pltpu.MemorySpace.SMEM))  # bias
    extra.append(b2d)
    in_specs += [x_spec] * num_inputs

    out = pl.pallas_call(
        _make_attention_kernel(num_inputs, k),
        out_shape=jax.ShapeDtypeStruct((rows, c_kernel), dtype),
        grid=(num_tiles,),
        in_specs=in_specs,
        out_specs=pl.BlockSpec((tb, c_kernel), lambda i: (i, 0)),
        compiler_params=pltpu.CompilerParams(
            dimension_semantics=("parallel",),   # batch tiles independent
            vmem_limit_bytes=min(int(vmem_cap * 0.75), 100 * 1024 * 1024),
        ),
    )(*extra, *xs)

    return out.reshape(B, C) if k > 1 else out


def attention_reference(inputs, weight, bias):
    stacked = jnp.stack(inputs, axis=1)                               # (B, N, C)
    logits = jnp.einsum("bnc,oc->bno", stacked, weight) + bias        # (B, N, 1)
    attn = jax.nn.softmax(logits, axis=1)
    return jnp.sum(stacked * attn, axis=1)                            # (B, C)


if __name__ == "__main__":
    B, N, C = 8, 4, 32          # batch=8, 4 stacked feature tensors, in_channels=32

    key = jax.random.PRNGKey(0)
    k_in, k_w, k_b = jax.random.split(key, 3)

    # N input feature tensors of shape (B, C)
    inputs = [
        jax.random.normal(jax.random.fold_in(k_in, i), (B, C), dtype=jnp.float32)
        for i in range(N)
    ]

    # Deterministic nn.Linear(C, 1) init (uniform(-1/sqrt(C), 1/sqrt(C)) like PyTorch)
    bound = 1.0 / (C ** 0.5)
    weight = jax.random.uniform(k_w, (1, C), minval=-bound, maxval=bound,
                                dtype=jnp.float32)
    bias = jax.random.uniform(k_b, (1,), minval=-bound, maxval=bound,
                              dtype=jnp.float32)

    out = attention_forward(inputs, weight, bias)
    out = jax.block_until_ready(out)

    ref = attention_reference(inputs, weight, bias)
    assert out.shape == (B, C)
    # Slightly loose tolerance because of the approximate (EUP) reciprocal.
    assert jnp.allclose(out, ref, atol=2e-3, rtol=2e-3), "mismatch vs reference"

    print("KERNEL_OK")
</pallas_src>

<mosaic_0001>
module attributes {stable_mosaic.version = 11 : i64} {
  func.func @kernel(%arg0: i32, %arg1: memref<128x4xf32, #tpu.memory_space<vmem>>, %arg2: memref<4x128xf32, #tpu.memory_space<vmem>>, %arg3: memref<1x1xf32, #tpu.memory_space<smem>>, %arg4: memref<2x128xf32, #tpu.memory_space<vmem>>, %arg5: memref<2x128xf32, #tpu.memory_space<vmem>>, %arg6: memref<2x128xf32, #tpu.memory_space<vmem>>, %arg7: memref<2x128xf32, #tpu.memory_space<vmem>>, %arg8: memref<2x128xf32, #tpu.memory_space<vmem>>) attributes {dimension_semantics = [#tpu.dimension_semantics<parallel>], iteration_bounds = array<i64: 1>, scalar_prefetch = 0 : i64, scratch_operands = 0 : i64, tpu.core_type = #tpu.core_type<tc>, window_params = [{pipeline_mode = #tpu.pipeline_mode<synchronous>, transform_indices = @transform_0, window_bounds = array<i64: 128, 4>}, {pipeline_mode = #tpu.pipeline_mode<synchronous>, transform_indices = @transform_1, window_bounds = array<i64: 4, 128>}, {transform_indices = @transform_2, window_bounds = array<i64: 1, 1>}, {transform_indices = @transform_3, window_bounds = array<i64: 2, 128>}, {transform_indices = @transform_4, window_bounds = array<i64: 2, 128>}, {transform_indices = @transform_5, window_bounds = array<i64: 2, 128>}, {transform_indices = @transform_6, window_bounds = array<i64: 2, 128>}, {transform_indices = @transform_7, window_bounds = array<i64: 2, 128>}]} {
    %c0 = arith.constant 0 : index
    %c0_0 = arith.constant 0 : index
    %0 = vector.load %arg1[%c0, %c0_0] : memref<128x4xf32, #tpu.memory_space<vmem>>, vector<128x4xf32>
    %c0_1 = arith.constant 0 : index
    %c0_2 = arith.constant 0 : index
    %1 = memref.load %arg3[%c0_1, %c0_2] : memref<1x1xf32, #tpu.memory_space<smem>>
    %c0_3 = arith.constant 0 : index
    %c0_4 = arith.constant 0 : index
    %2 = vector.load %arg4[%c0_3, %c0_4] : memref<2x128xf32, #tpu.memory_space<vmem>>, vector<2x128xf32>
    %cst = arith.constant dense<0.000000e+00> : vector<2x4xf32>
    %3 = tpu.matmul %2, %0, %cst {dimension_numbers = #tpu.dot_dimension_numbers<[1], [0], [0], [1], [0, 0, 1, 1], [], []>} : vector<2x128xf32>, vector<128x4xf32>, vector<2x4xf32> -> vector<2x4xf32>
    %4 = vector.broadcast %1 : f32 to vector<2x4xf32>
    %5 = arith.addf %3, %4 : vector<2x4xf32>
    %c0_5 = arith.constant 0 : index
    %c0_6 = arith.constant 0 : index
    %6 = vector.load %arg5[%c0_5, %c0_6] : memref<2x128xf32, #tpu.memory_space<vmem>>, vector<2x128xf32>
    %cst_7 = arith.constant dense<0.000000e+00> : vector<2x4xf32>
    %7 = tpu.matmul %6, %0, %cst_7 {dimension_numbers = #tpu.dot_dimension_numbers<[1], [0], [0], [1], [0, 0, 1, 1], [], []>} : vector<2x128xf32>, vector<128x4xf32>, vector<2x4xf32> -> vector<2x4xf32>
    %8 = vector.broadcast %1 : f32 to vector<2x4xf32>
    %9 = arith.addf %7, %8 : vector<2x4xf32>
    %c0_8 = arith.constant 0 : index
    %c0_9 = arith.constant 0 : index
    %10 = vector.load %arg6[%c0_8, %c0_9] : memref<2x128xf32, #tpu.memory_space<vmem>>, vector<2x128xf32>
    %cst_10 = arith.constant dense<0.000000e+00> : vector<2x4xf32>
    %11 = tpu.matmul %10, %0, %cst_10 {dimension_numbers = #tpu.dot_dimension_numbers<[1], [0], [0], [1], [0, 0, 1, 1], [], []>} : vector<2x128xf32>, vector<128x4xf32>, vector<2x4xf32> -> vector<2x4xf32>
    %12 = vector.broadcast %1 : f32 to vector<2x4xf32>
    %13 = arith.addf %11, %12 : vector<2x4xf32>
    %c0_11 = arith.constant 0 : index
    %c0_12 = arith.constant 0 : index
    %14 = vector.load %arg7[%c0_11, %c0_12] : memref<2x128xf32, #tpu.memory_space<vmem>>, vector<2x128xf32>
    %cst_13 = arith.constant dense<0.000000e+00> : vector<2x4xf32>
    %15 = tpu.matmul %14, %0, %cst_13 {dimension_numbers = #tpu.dot_dimension_numbers<[1], [0], [0], [1], [0, 0, 1, 1], [], []>} : vector<2x128xf32>, vector<128x4xf32>, vector<2x4xf32> -> vector<2x4xf32>
    %16 = vector.broadcast %1 : f32 to vector<2x4xf32>
    %17 = arith.addf %15, %16 : vector<2x4xf32>
    %18 = arith.maximumf %5, %9 : vector<2x4xf32>
    %19 = arith.maximumf %18, %13 : vector<2x4xf32>
    %20 = arith.maximumf %19, %17 : vector<2x4xf32>
    %21 = arith.subf %5, %20 : vector<2x4xf32>
    %22 = math.exp %21 : vector<2x4xf32>
    %23 = arith.subf %9, %20 : vector<2x4xf32>
    %24 = math.exp %23 : vector<2x4xf32>
    %25 = arith.subf %13, %20 : vector<2x4xf32>
    %26 = math.exp %25 : vector<2x4xf32>
    %27 = arith.subf %17, %20 : vector<2x4xf32>
    %28 = math.exp %27 : vector<2x4xf32>
    %29 = arith.addf %22, %24 : vector<2x4xf32>
    %30 = arith.addf %29, %26 : vector<2x4xf32>
    %31 = arith.addf %30, %28 : vector<2x4xf32>
    %32 = tpu.reciprocal %31 {approx = true} : vector<2x4xf32> -> vector<2x4xf32>
    %33 = arith.mulf %22, %32 : vector<2x4xf32>
    %c0_14 = arith.constant 0 : index
    %c0_15 = arith.constant 0 : index
    %34 = vector.load %arg2[%c0_14, %c0_15] : memref<4x128xf32, #tpu.memory_space<vmem>>, vector<4x128xf32>
    %cst_16 = arith.constant dense<0.000000e+00> : vector<2x128xf32>
    %35 = tpu.matmul %33, %34, %cst_16 {dimension_numbers = #tpu.dot_dimension_numbers<[1], [0], [0], [1], [0, 0, 1, 1], [], []>} : vector<2x4xf32>, vector<4x128xf32>, vector<2x128xf32> -> vector<2x128xf32>
    %c0_17 = arith.constant 0 : index
    %c0_18 = arith.constant 0 : index
    %36 = vector.load %arg4[%c0_17, %c0_18] : memref<2x128xf32, #tpu.memory_space<vmem>>, vector<2x128xf32>
    %37 = arith.mulf %35, %36 : vector<2x128xf32>
    %38 = arith.mulf %24, %32 : vector<2x4xf32>
    %c0_19 = arith.constant 0 : index
    %c0_20 = arith.constant 0 : index
    %39 = vector.load %arg2[%c0_19, %c0_20] : memref<4x128xf32, #tpu.memory_space<vmem>>, vector<4x128xf32>
    %cst_21 = arith.constant dense<0.000000e+00> : vector<2x128xf32>
    %40 = tpu.matmul %38, %39, %cst_21 {dimension_numbers = #tpu.dot_dimension_numbers<[1], [0], [0], [1], [0, 0, 1, 1], [], []>} : vector<2x4xf32>, vector<4x128xf32>, vector<2x128xf32> -> vector<2x128xf32>
    %c0_22 = arith.constant 0 : index
    %c0_23 = arith.constant 0 : index
    %41 = vector.load %arg5[%c0_22, %c0_23] : memref<2x128xf32, #tpu.memory_space<vmem>>, vector<2x128xf32>
    %42 = arith.mulf %40, %41 : vector<2x128xf32>
    %43 = arith.addf %37, %42 : vector<2x128xf32>
    %44 = arith.mulf %26, %32 : vector<2x4xf32>
    %c0_24 = arith.constant 0 : index
    %c0_25 = arith.constant 0 : index
    %45 = vector.load %arg2[%c0_24, %c0_25] : memref<4x128xf32, #tpu.memory_space<vmem>>, vector<4x128xf32>
    %cst_26 = arith.constant dense<0.000000e+00> : vector<2x128xf32>
    %46 = tpu.matmul %44, %45, %cst_26 {dimension_numbers = #tpu.dot_dimension_numbers<[1], [0], [0], [1], [0, 0, 1, 1], [], []>} : vector<2x4xf32>, vector<4x128xf32>, vector<2x128xf32> -> vector<2x128xf32>
    %c0_27 = arith.constant 0 : index
    %c0_28 = arith.constant 0 : index
    %47 = vector.load %arg6[%c0_27, %c0_28] : memref<2x128xf32, #tpu.memory_space<vmem>>, vector<2x128xf32>
    %48 = arith.mulf %46, %47 : vector<2x128xf32>
    %49 = arith.addf %43, %48 : vector<2x128xf32>
    %50 = arith.mulf %28, %32 : vector<2x4xf32>
    %c0_29 = arith.constant 0 : index
    %c0_30 = arith.constant 0 : index
    %51 = vector.load %arg2[%c0_29, %c0_30] : memref<4x128xf32, #tpu.memory_space<vmem>>, vector<4x128xf32>
    %cst_31 = arith.constant dense<0.000000e+00> : vector<2x128xf32>
    %52 = tpu.matmul %50, %51, %cst_31 {dimension_numbers = #tpu.dot_dimension_numbers<[1], [0], [0], [1], [0, 0, 1, 1], [], []>} : vector<2x4xf32>, vector<4x128xf32>, vector<2x128xf32> -> vector<2x128xf32>
    %c0_32 = arith.constant 0 : index
    %c0_33 = arith.constant 0 : index
    %53 = vector.load %arg7[%c0_32, %c0_33] : memref<2x128xf32, #tpu.memory_space<vmem>>, vector<2x128xf32>
    %54 = arith.mulf %52, %53 : vector<2x128xf32>
    %55 = arith.addf %49, %54 : vector<2x128xf32>
    %c0_34 = arith.constant 0 : index
    %c0_35 = arith.constant 0 : index
    %56 = vector.load %arg8[%c0_34, %c0_35] : memref<2x128xf32, #tpu.memory_space<vmem>>, vector<2x128xf32>
    tpu.vector_store %arg8[%c0_34, %c0_35], %55 {strides = array<i32>} : memref<2x128xf32, #tpu.memory_space<vmem>>, vector<2x128xf32>,
    return
  }
  func.func @transform_0(%arg0: i32) -> (i32, i32) {
    %c0_i32 = arith.constant 0 : i32
    %c0_i32_0 = arith.constant 0 : i32
    %c0_i32_1 = arith.constant 0 : i32
    return %c0_i32, %c0_i32_0 : i32, i32
  }
  func.func @transform_1(%arg0: i32) -> (i32, i32) {
    %c0_i32 = arith.constant 0 : i32
    %c0_i32_0 = arith.constant 0 : i32
    %c0_i32_1 = arith.constant 0 : i32
    return %c0_i32, %c0_i32_0 : i32, i32
  }
  func.func @transform_2(%arg0: i32) -> (i32, i32) {
    %c0_i32 = arith.constant 0 : i32
    %c0_i32_0 = arith.constant 0 : i32
    %c0_i32_1 = arith.constant 0 : i32
    return %c0_i32, %c0_i32_0 : i32, i32
  }
  func.func @transform_3(%arg0: i32) -> (i32, i32) {
    %c0_i32 = arith.constant 0 : i32
    %c0_i32_0 = arith.constant 0 : i32
    return %arg0, %c0_i32 : i32, i32
  }
  func.func @transform_4(%arg0: i32) -> (i32, i32) {
    %c0_i32 = arith.constant 0 : i32
    %c0_i32_0 = arith.constant 0 : i32
    return %arg0, %c0_i32 : i32, i32
  }
  func.func @transform_5(%arg0: i32) -> (i32, i32) {
    %c0_i32 = arith.constant 0 : i32
    %c0_i32_0 = arith.constant 0 : i32
    return %arg0, %c0_i32 : i32, i32
  }
  func.func @transform_6(%arg0: i32) -> (i32, i32) {
    %c0_i32 = arith.constant 0 : i32
    %c0_i32_0 = arith.constant 0 : i32
    return %arg0, %c0_i32 : i32, i32
  }
  func.func @transform_7(%arg0: i32) -> (i32, i32) {
    %c0_i32 = arith.constant 0 : i32
    %c0_i32_0 = arith.constant 0 : i32
    return %arg0, %c0_i32 : i32, i32
  }
}

</mosaic_0001>

<llo_original>
// kernel: tpu_custom_call.1
$region0: #{tpu_custom_call.1}
  #allocation0 [shape = 'u32[]', space=smem, size = 0x4, offset = 0x4, fixed_abs, tag = 'smem constant byte address 0x4 - core index']
  #allocation1 [shape = 'u32[72,128]{1,0:T(1,128)}', space=vmem, size = 0x9000, scoped, tag = 'internal scratch']
  #allocation2 [shape = 'f32[1,1]{1,0:T(1,128)S(6)}', space=smem, size = 0x200, scoped, tag = 'scoped memory for tpu_custom_call.1']
  %s0 = inlined_call_operand.vmem [shape: f32[128,4], index: 0, kind: input, shape index: {}]
  %s1 = inlined_call_operand.vmem [shape: f32[4,128], index: 1, kind: input, shape index: {}]
  %s2 = inlined_call_operand.<no memory space> [shape: f32[1,1], index: 2, kind: input, shape index: {}]
  %s3 = inlined_call_operand.vmem [shape: f32[2,128], index: 3, kind: input, shape index: {}]
  %s4 = inlined_call_operand.vmem [shape: f32[2,128], index: 4, kind: input, shape index: {}]
  %s5 = inlined_call_operand.vmem [shape: f32[2,128], index: 5, kind: input, shape index: {}]
  %s6 = inlined_call_operand.vmem [shape: f32[2,128], index: 6, kind: input, shape index: {}]
  %s7 = inlined_call_operand.hbm [shape: f32[2,128], index: 7, kind: output, shape index: {}]
  %s8 = sld [smem:[#allocation0]]
  $region38: #{tpu_custom_call.1} parent=0
    _
  %s10 = ssub.s32 1, %s8
  %s11 = scalar_select 0, %s10, %s8
  %12 = sst [smem:[#allocation2]] %s2
  $region1: #{tpu_custom_call.1} parent=0
    #allocation3 [shape = 'u8[1024]{0}', space=vmem, size = 0x400, scoped, tag = 'output window, operand 0, single buffered']
    #allocation4 [shape = 's32[1]{0}', space=sflag, size = 0x4, scoped, tag = 'scoped memory for tpu_custom_call.1']
    %13 = vsyncpa [#allocation4], 0
    // Predicated region
    $region2: #{tpu_custom_call.1} parent=1 // pred_check
      _
    $region3: #{tpu_custom_call.1} parent=1 // pred_check_branch
      %15 = sbr.rel (0) target = $region5
    $region4: #{tpu_custom_call.1} parent=1 // pred_region
      _
    $region5: #{tpu_custom_call.1} parent=1 // pred_fallthru
      _
    // Predicated region
    $region6: #{tpu_custom_call.1} parent=1 // pred_check
      _
    $region7: #{tpu_custom_call.1} parent=1 // pred_check_branch
      %17 = sbr.rel (0) target = $region9
    $region8: #{tpu_custom_call.1} parent=1 // pred_region
      _
    $region9: #{tpu_custom_call.1} parent=1 // pred_fallthru
      _
    // Predicated region
    $region10: #{tpu_custom_call.1} parent=1 // pred_check
      _
    $region11: #{tpu_custom_call.1} parent=1 // pred_check_branch
      %19 = sbr.rel (0) target = $region13
    $region12: #{tpu_custom_call.1} parent=1 // pred_region
      _
    $region13: #{tpu_custom_call.1} parent=1 // pred_fallthru
      _
    // Predicated region
    $region14: #{tpu_custom_call.1} parent=1 // pred_check
      _
    $region15: #{tpu_custom_call.1} parent=1 // pred_check_branch
      %21 = sbr.rel (0) target = $region17
    $region16: #{tpu_custom_call.1} parent=1 // pred_region
      _
    $region17: #{tpu_custom_call.1} parent=1 // pred_fallthru
      _
    // Predicated region
    $region18: #{tpu_custom_call.1} parent=1 // pred_check
      _
    $region19: #{tpu_custom_call.1} parent=1 // pred_check_branch
      %23 = sbr.rel (0) target = $region21
    $region20: #{tpu_custom_call.1} parent=1 // pred_region
      _
    $region21: #{tpu_custom_call.1} parent=1 // pred_fallthru
      _
    // Predicated region
    $region22: #{tpu_custom_call.1} parent=1 // pred_check
      _
    $region23: #{tpu_custom_call.1} parent=1 // pred_check_branch
      %25 = sbr.rel (0) target = $region25
    $region24: #{tpu_custom_call.1} parent=1 // pred_region
      _
    $region25: #{tpu_custom_call.1} parent=1 // pred_fallthru
      _
    // Predicated region
    $region26: #{tpu_custom_call.1} parent=1 // pred_check
      _
    $region27: #{tpu_custom_call.1} parent=1 // pred_check_branch
      %27 = sbr.rel (0) target = $region29
    $region28: #{tpu_custom_call.1} parent=1 // pred_region
      _
    $region29: #{tpu_custom_call.1} parent=1 // pred_fallthru
      _
    %v28 = vld [vmem:[%s0] sm:$0xff]
    %v29 = vld [vmem:[%s0 + $0x8] sm:$0xff]
    %v30 = vld [vmem:[%s0 + $0x10] sm:$0xff]
    %v31 = vld [vmem:[%s0 + $0x18] sm:$0xff]
    %v32 = vld [vmem:[%s0 + $0x20] sm:$0xff]
    %v33 = vld [vmem:[%s0 + $0x28] sm:$0xff]
    %v34 = vld [vmem:[%s0 + $0x30] sm:$0xff]
    %v35 = vld [vmem:[%s0 + $0x38] sm:$0xff]
    %v36 = vld [vmem:[%s0 + $0x40] sm:$0xff]
    %v37 = vld [vmem:[%s0 + $0x48] sm:$0xff]
    %v38 = vld [vmem:[%s0 + $0x50] sm:$0xff]
    %v39 = vld [vmem:[%s0 + $0x58] sm:$0xff]
    %v40 = vld [vmem:[%s0 + $0x60] sm:$0xff]
    %v41 = vld [vmem:[%s0 + $0x68] sm:$0xff]
    %v42 = vld [vmem:[%s0 + $0x70] sm:$0xff]
    %v43 = vld [vmem:[%s0 + $0x78] sm:$0xff]
    %s44 = sld [smem:[#allocation2]]
    %v45 = vld [vmem:[%s3] sm:$0x3]
    %v46 = vstv %s44
    %47 = vmatpush.msra.mxu0 %v43
    %48 = vmatpush.msra.mxu0 %v42
    %49 = vmatpush.msra.mxu0 %v41
    %50 = vmatpush.msra.mxu0 %v40
    %51 = vmatpush.msra.mxu0 %v39
    %52 = vmatpush.msra.mxu0 %v38
    %53 = vmatpush.msra.mxu0 %v37
    %54 = vmatpush.msra.mxu0 %v36
    %55 = vmatpush.msra.mxu0 %v35
    %56 = vmatpush.msra.mxu0 %v34
    %57 = vmatpush.msra.mxu0 %v33
    %58 = vmatpush.msra.mxu0 %v32
    %59 = vmatpush.msra.mxu0 %v31
    %60 = vmatpush.msra.mxu0 %v30
    %61 = vmatpush.msra.mxu0 %v29
    %62 = vmatpush.msra.mxu0 %v28
    %63 = vmatmul.f32.gmra.mxu0 %v45
    %v64 = vpop.f32.mrf.mxu0
    %v65 = vadd.f32 %v46, %v64
    %66 = vdwg.mxu0
    %v67 = vld [vmem:[%s4] sm:$0x3]
    %68 = vmatpush.msra.mxu0 %v43
    %69 = vmatpush.msra.mxu0 %v42
    %70 = vmatpush.msra.mxu0 %v41
    %71 = vmatpush.msra.mxu0 %v40
    %72 = vmatpush.msra.mxu0 %v39
    %73 = vmatpush.msra.mxu0 %v38
    %74 = vmatpush.msra.mxu0 %v37
    %75 = vmatpush.msra.mxu0 %v36
    %76 = vmatpush.msra.mxu0 %v35
    %77 = vmatpush.msra.mxu0 %v34
    %78 = vmatpush.msra.mxu0 %v33
    %79 = vmatpush.msra.mxu0 %v32
    %80 = vmatpush.msra.mxu0 %v31
    %81 = vmatpush.msra.mxu0 %v30
    %82 = vmatpush.msra.mxu0 %v29
    %83 = vmatpush.msra.mxu0 %v28
    %84 = vmatmul.f32.gmra.mxu0 %v67
    %v85 = vpop.f32.mrf.mxu0
    %v86 = vadd.f32 %v46, %v85
    %87 = vdwg.mxu0
    %v88 = vld [vmem:[%s5] sm:$0x3]
    %89 = vmatpush.msra.mxu0 %v43
    %90 = vmatpush.msra.mxu0 %v42
    %91 = vmatpush.msra.mxu0 %v41
    %92 = vmatpush.msra.mxu0 %v40
    %93 = vmatpush.msra.mxu0 %v39
    %94 = vmatpush.msra.mxu0 %v38
    %95 = vmatpush.msra.mxu0 %v37
    %96 = vmatpush.msra.mxu0 %v36
    %97 = vmatpush.msra.mxu0 %v35
    %98 = vmatpush.msra.mxu0 %v34
    %99 = vmatpush.msra.mxu0 %v33
    %100 = vmatpush.msra.mxu0 %v32
    %101 = vmatpush.msra.mxu0 %v31
    %102 = vmatpush.msra.mxu0 %v30
    %103 = vmatpush.msra.mxu0 %v29
    %104 = vmatpush.msra.mxu0 %v28
    %105 = vmatmul.f32.gmra.mxu0 %v88
    %v106 = vpop.f32.mrf.mxu0
    %v107 = vadd.f32 %v46, %v106
    %108 = vdwg.mxu0
    %v109 = vld [vmem:[%s6] sm:$0x3]
    %110 = vmatpush.msra.mxu0 %v43
    %111 = vmatpush.msra.mxu0 %v42
    %112 = vmatpush.msra.mxu0 %v41
    %113 = vmatpush.msra.mxu0 %v40
    %114 = vmatpush.msra.mxu0 %v39
    %115 = vmatpush.msra.mxu0 %v38
    %116 = vmatpush.msra.mxu0 %v37
    %117 = vmatpush.msra.mxu0 %v36
    %118 = vmatpush.msra.mxu0 %v35
    %119 = vmatpush.msra.mxu0 %v34
    %120 = vmatpush.msra.mxu0 %v33
    %121 = vmatpush.msra.mxu0 %v32
    %122 = vmatpush.msra.mxu0 %v31
    %123 = vmatpush.msra.mxu0 %v30
    %124 = vmatpush.msra.mxu0 %v29
    %125 = vmatpush.msra.mxu0 %v28
    %126 = vmatmul.f32.gmra.mxu0 %v109
    %v127 = vpop.f32.mrf.mxu0
    %v128 = vadd.f32 %v46, %v127
    %129 = vdwg.mxu0
    %v130 = vmax.f32 %v65, %v86
    %v131 = vmax.f32 %v130, %v107
    %v132 = vmax.f32 %v131, %v128
    %v133 = vsub.f32 %v65, %v132
    %v134 = vmul.f32 %v133, 1.442695
    %v135 = vpow.pop %v134
    %v136 = vsub.f32 %v86, %v132
    %v137 = vmul.f32 %v136, 1.442695
    %v138 = vpow.pop %v137
    %v139 = vsub.f32 %v107, %v132
    %v140 = vmul.f32 %v139, 1.442695
    %v141 = vpow.pop %v140
    %v142 = vsub.f32 %v128, %v132
    %v143 = vmul.f32 %v142, 1.442695
    %v144 = vpow.pop %v143
    %v145 = vadd.f32 %v135, %v138
    %v146 = vadd.f32 %v145, %v141
    %v147 = vadd.f32 %v146, %v144
    %v148 = vrcp.pop %v147
    %v149 = vmul.f32 %v135, %v148
    %v150 = vld [vmem:[%s1] sm:$0xf]
    %vm151 = vcmask 31744
    %v153 = vsel %vm151, %v149, 0
    %vm155 = vcmask 1043456
    %v157 = vsel %vm155, %v150, 0
    %159 = vmatpush.msra.mxu0 0.0
    %160 = vmatpush.msra.mxu0 0.0
    %161 = vmatpush.msra.mxu0 0.0
    %162 = vmatpush.msra.mxu0 0.0
    %163 = vmatpush.msra.mxu0 0.0
    %164 = vmatpush.msra.mxu0 0.0
    %165 = vmatpush.msra.mxu0 0.0
    %166 = vmatpush.msra.mxu0 0.0
    %167 = vmatpush.msra.mxu0 0.0
    %168 = vmatpush.msra.mxu0 0.0
    %169 = vmatpush.msra.mxu0 0.0
    %170 = vmatpush.msra.mxu0 0.0
    %171 = vmatpush.msra.mxu0 0.0
    %172 = vmatpush.msra.mxu0 0.0
    %173 = vmatpush.msra.mxu0 0.0
    %174 = vmatpush.msra.mxu0 %v157
    %175 = vmatmul.f32.gmra.mxu0 %v153
    %v176 = vpop.f32.mrf.mxu0
    %v177 = vadd.f32 0.0, %v176
    %178 = vdwg.mxu0
    %v179 = vmul.f32 %v177, %v45
    %v180 = vmul.f32 %v138, %v148
    %v182 = vsel %vm151, %v180, 0
    %184 = vmatpush.msra.mxu0 0.0
    %185 = vmatpush.msra.mxu0 0.0
    %186 = vmatpush.msra.mxu0 0.0
    %187 = vmatpush.msra.mxu0 0.0
    %188 = vmatpush.msra.mxu0 0.0
    %189 = vmatpush.msra.mxu0 0.0
    %190 = vmatpush.msra.mxu0 0.0
    %191 = vmatpush.msra.mxu0 0.0
    %192 = vmatpush.msra.mxu0 0.0
    %193 = vmatpush.msra.mxu0 0.0
    %194 = vmatpush.msra.mxu0 0.0
    %195 = vmatpush.msra.mxu0 0.0
    %196 = vmatpush.msra.mxu0 0.0
    %197 = vmatpush.msra.mxu0 0.0
    %198 = vmatpush.msra.mxu0 0.0
    %199 = vmatpush.msra.mxu0 %v157
    %200 = vmatmul.f32.gmra.mxu0 %v182
    %v201 = vpop.f32.mrf.mxu0
    %v202 = vadd.f32 0.0, %v201
    %203 = vdwg.mxu0
    %v204 = vmul.f32 %v202, %v67
    %v205 = vadd.f32 %v179, %v204
    %v206 = vmul.f32 %v141, %v148
    %v208 = vsel %vm151, %v206, 0
    %210 = vmatpush.msra.mxu0 0.0
    %211 = vmatpush.msra.mxu0 0.0
    %212 = vmatpush.msra.mxu0 0.0
    %213 = vmatpush.msra.mxu0 0.0
    %214 = vmatpush.msra.mxu0 0.0
    %215 = vmatpush.msra.mxu0 0.0
    %216 = vmatpush.msra.mxu0 0.0
    %217 = vmatpush.msra.mxu0 0.0
    %218 = vmatpush.msra.mxu0 0.0
    %219 = vmatpush.msra.mxu0 0.0
    %220 = vmatpush.msra.mxu0 0.0
    %221 = vmatpush.msra.mxu0 0.0
    %222 = vmatpush.msra.mxu0 0.0
    %223 = vmatpush.msra.mxu0 0.0
    %224 = vmatpush.msra.mxu0 0.0
    %225 = vmatpush.msra.mxu0 %v157
    %226 = vmatmul.f32.gmra.mxu0 %v208
    %v227 = vpop.f32.mrf.mxu0
    %v228 = vadd.f32 0.0, %v227
    %229 = vdwg.mxu0
    %v230 = vmul.f32 %v228, %v88
    %v231 = vadd.f32 %v205, %v230
    %v232 = vmul.f32 %v144, %v148
    %v234 = vsel %vm151, %v232, 0
    %236 = vmatpush.msra.mxu0 0.0
    %237 = vmatpush.msra.mxu0 0.0
    %238 = vmatpush.msra.mxu0 0.0
    %239 = vmatpush.msra.mxu0 0.0
    %240 = vmatpush.msra.mxu0 0.0
    %241 = vmatpush.msra.mxu0 0.0
    %242 = vmatpush.msra.mxu0 0.0
    %243 = vmatpush.msra.mxu0 0.0
    %244 = vmatpush.msra.mxu0 0.0
    %245 = vmatpush.msra.mxu0 0.0
    %246 = vmatpush.msra.mxu0 0.0
    %247 = vmatpush.msra.mxu0 0.0
    %248 = vmatpush.msra.mxu0 0.0
    %249 = vmatpush.msra.mxu0 0.0
    %250 = vmatpush.msra.mxu0 0.0
    %251 = vmatpush.msra.mxu0 %v157
    %252 = vmatmul.f32.gmra.mxu0 %v234
    %v253 = vpop.f32.mrf.mxu0
    %v254 = vadd.f32 0.0, %v253
    %255 = vdwg.mxu0
    %v256 = vmul.f32 %v254, %v109
    %v257 = vadd.f32 %v231, %v256
    %258 = vst [vmem:[#allocation3] sm:$0x3] %v257
    // Predicated region
    $region30: #{tpu_custom_call.1} parent=1 // pred_check
      _
    $region31: #{tpu_custom_call.1} parent=1 // pred_check_branch
      %260 = sbr.rel (0) target = $region33
    $region32: #{tpu_custom_call.1} parent=1 // pred_region
      %262 = vsyncadd [#allocation4], 0
      %s264 = sshll.u32 [#allocation3], 4
      %s265 = int_to_ptr.vmem [resolvable:$true] %s264
      %s266 = sshll.u32 %s7, 4
      %s267 = int_to_ptr.hbm [resolvable:$true] %s266
      %269 = dma.vmem_to_hbm [thread:$0]  %s265, 32, %s267, [#allocation4]
    $region33: #{tpu_custom_call.1} parent=1 // pred_fallthru
      _
    // Predicated region
    $region34: #{tpu_custom_call.1} parent=1 // pred_check
      _
    $region35: #{tpu_custom_call.1} parent=1 // pred_check_branch
      %271 = sbr.rel (0) target = $region37
    $region36: #{tpu_custom_call.1} parent=1 // pred_region
      %273 = dma.done [#allocation4], 32
    $region37: #{tpu_custom_call.1} parent=1 // pred_fallthru
      _
    %274 = vsyncpa [#allocation4], 1

</llo_original>
